<compile_context>
chip_gen: v6e
topology: v6e:2x2x1
jax: 0.10.0
libtpu: 0.0.40
codegen_flags: <defaults>
</compile_context>

<pallas_src>
import functools

import jax
import jax.numpy as jnp
from jax.experimental import pallas as pl
from jax.experimental.pallas import tpu as pltpu


def _round_up(a, b):
    return ((a + b - 1) // b) * b


def _tpu_generation():
    """Best-effort TPU generation from device_kind (None if unknown)."""
    try:
        kind = jax.devices()[0].device_kind.lower()
    except Exception:
        return None
    for g in (7, 6, 5, 4, 3, 2):
        if f"v{g}" in kind or f"tpu{g}" in kind:
            return g
    return None


def _default_tiles():
    """(tm, tf, vmem_limit_bytes) defaults per TPU generation."""
    gen = _tpu_generation()
    mib = 1024 * 1024
    if gen is None:
        return 512, 256, None
    if gen >= 7:          # v7x: 64 MiB VMEM/TC, ~310 FLOP/B ridge
        return 512, 256, 52 * mib
    if gen == 6:          # v6e: 128 MiB VMEM, ~650 FLOP/B ridge
        return 768, 512, 96 * mib
    if gen == 5:          # v5e/v5p: ridge ~240 FLOP/B; raise 16 MiB scoped default
        return 256, 512, 64 * mib
    return 256, 256, None  # older chips: conservative


def _choose_row_tiling(M, tm_target, sub):
    """Pick (tm_eff, n_m, M_pad) minimizing padding waste for ragged M."""
    M_sub = _round_up(M, sub)
    if M_sub <= tm_target:
        return M_sub, 1, M_sub
    n_m = -(-M_sub // tm_target)                      # ceil
    tm_eff = _round_up(-(-M_sub // n_m), sub)         # even split, sublane-aligned
    return tm_eff, n_m, n_m * tm_eff


def _hymba_mlp_kernel(x_ref, w1_ref, wd_ref, o_ref, acc_ref, *, tf, act):
    # x_ref  : (tm, H)                activation row tile (native dtype -> MXU)
    # w1_ref : (H, 2*tf) [gate|up]    (silu)  or  (H, tf)  (relu2)
    # wd_ref : (tf, H)                down_proj tile
    # o_ref  : (tm, H)                output tile (revisited across F axis)
    # acc_ref: (tm, H) f32            VMEM scratch accumulator
    # grid = (n_split, n_m, n_f); F reduction axis is axis 2 (last).
    @pl.when(pl.program_id(2) == 0)
    def _():
        acc_ref[...] = jnp.zeros_like(acc_ref)

    x = x_ref[...]  # keep native dtype (bf16 in production) for the MXU

    if act == "silu":
        gu = jnp.dot(x, w1_ref[...], preferred_element_type=jnp.float32)
        gate = gu[:, :tf]
        up = gu[:, tf:]
        hidden = (gate * jax.nn.sigmoid(gate)) * up
    else:  # relu2
        u = jnp.dot(x, w1_ref[...], preferred_element_type=jnp.float32)
        hidden = jnp.square(jnp.maximum(u, 0.0))

    acc_ref[...] += jnp.dot(hidden.astype(wd_ref.dtype), wd_ref[...],
                            preferred_element_type=jnp.float32)

    @pl.when(pl.program_id(2) == pl.num_programs(2) - 1)
    def _():
        o_ref[...] = acc_ref[...].astype(o_ref.dtype)


def prepare_hymba_mlp_weights(w_up, w_down, w_gate=None, *, tf=None, act="silu",
                              compute_dtype=None):
    """One-time weight prep: F padding, transpose, per-F-tile gate/up interleave.

    torch convention: w_* are [out_features, in_features].
    Do this once per model, outside the per-token hot path.
    """
    if tf is None:
        _, tf, _ = _default_tiles()
    F, H = w_up.shape

    # F tile: never shrink below the target -> zero-pad F up instead (avoids
    # tiny tf / full-F fallback for F values with no nice divisor).
    if F <= tf:
        tf_eff = F
        F_pad = F
    else:
        tf_eff = max(128, (tf // 128) * 128)
        F_pad = _round_up(F, tf_eff)

    def pad_f_rows(w):  # (F, H) -> (F_pad, H); padded rows are zero -> no-op math
        return jnp.pad(w, ((0, F_pad - F), (0, 0))) if F_pad != F else w

    w_up_p = pad_f_rows(w_up)
    w_down_p = (jnp.pad(w_down, ((0, 0), (0, F_pad - F)))
                if F_pad != F else w_down)
    wd_t = w_down_p.T  # (F_pad, H)

    if act == "silu":
        if w_gate is None:
            raise ValueError("silu variant requires gate_proj weights")
        w_gate_p = pad_f_rows(w_gate)
        nf = F_pad // tf_eff
        wg_t = w_gate_p.T.reshape(H, nf, tf_eff)
        wu_t = w_up_p.T.reshape(H, nf, tf_eff)
        # interleave per F-tile so a single (H, 2*tf) block feeds one fused GEMM
        w1 = jnp.concatenate([wg_t, wu_t], axis=2).reshape(H, 2 * F_pad)
    elif act == "relu2":
        w1 = w_up_p.T  # (H, F_pad)
    else:
        raise NotImplementedError(f"No such hidden_act: {act}")

    if compute_dtype is not None:  # bf16 in production
        w1 = w1.astype(compute_dtype)
        wd_t = wd_t.astype(compute_dtype)
    return w1, wd_t, tf_eff


def hymba_mlp_prepared(x, w1, wd_t, tf_eff, *, act="silu", tm=None,
                       vmem_limit_bytes=None, n_split=None,
                       weight_buffers=None, compute_dtype=None):
    """x: [B, S, H]; w1/wd_t/tf_eff from prepare_hymba_mlp_weights."""
    B, S, H = x.shape
    F_pad = wd_t.shape[0]
    M = B * S

    tm_d, _, vmem_d = _default_tiles()
    if tm is None:
        tm = tm_d
    if vmem_limit_bytes is None:
        vmem_limit_bytes = vmem_d
    if compute_dtype is not None:
        x = x.astype(compute_dtype)

    # Row tiling: sublane-aligned, big for arithmetic intensity, but split M
    # evenly across tiles for ragged M so padding waste stays tiny.
    sub = 8 if x.dtype == jnp.float32 else 16
    tm = max(sub, (tm // sub) * sub)
    tm_eff, n_m, M_pad = _choose_row_tiling(M, tm, sub)

    x2d = x.reshape(M, H)
    if M_pad != M:
        x2d = jnp.pad(x2d, ((0, M_pad - M), (0, 0)))

    n_f = F_pad // tf_eff

    # Optional split of the F reduction across TensorCores for small-M cases
    # (decode / short prefill) where n_m == 1 would leave a core idle.
    if n_split is None:
        gen = _tpu_generation()
        n_split = 2 if (gen is not None and gen >= 7 and n_m == 1
                        and n_f >= 2 and n_f % 2 == 0) else 1
    if n_split < 1 or n_f % n_split != 0:
        n_split = 1
    n_f_c = n_f // n_split

    w1_cols = 2 * tf_eff if act == "silu" else tf_eff
    out_dtype = x.dtype if n_split == 1 else jnp.float32

    kernel = functools.partial(_hymba_mlp_kernel, tf=tf_eff, act=act)

    def w_spec(shape, idx):
        if weight_buffers is not None:
            # deeper weight buffering for memory-bound (decode) regimes
            return pl.BlockSpec(shape, idx, pipeline_mode=pl.Buffered(weight_buffers))
        return pl.BlockSpec(shape, idx)

    out3d = pl.pallas_call(
        kernel,
        out_shape=jax.ShapeDtypeStruct((n_split, M_pad, H), out_dtype),
        grid_spec=pltpu.PrefetchScalarGridSpec(
            num_scalar_prefetch=0,
            grid=(n_split, n_m, n_f_c),               # F reduction axis last
            in_specs=[
                pl.BlockSpec((tm_eff, H), lambda c, i, f: (i, 0)),       # x rows
                w_spec((H, w1_cols), lambda c, i, f: (0, c * n_f_c + f)),  # gate|up
                w_spec((tf_eff, H), lambda c, i, f: (c * n_f_c + f, 0)),   # down
            ],
            out_specs=pl.BlockSpec((None, tm_eff, H),
                                   lambda c, i, f: (c, i, 0)),
            scratch_shapes=[pltpu.VMEM((tm_eff, H), jnp.float32)],
        ),
        compiler_params=pltpu.CompilerParams(
            dimension_semantics=("parallel", "parallel", "arbitrary"),
            vmem_limit_bytes=vmem_limit_bytes,
        ),
    )(x2d, w1, wd_t)

    if n_split == 1:
        out2d = out3d[0]
    else:
        out2d = out3d.sum(axis=0).astype(x.dtype)  # tiny wrapper-side add
    return out2d[:M].reshape(B, S, H)


def hymba_mlp(x, w_gate, w_up, w_down, *, act="silu", tm=None, tf=None,
              vmem_limit_bytes=None, n_split=None, weight_buffers=None,
              compute_dtype=None):
    """Convenience wrapper: prep weights + run (prep should be hoisted in prod)."""
    w1, wd_t, tf_eff = prepare_hymba_mlp_weights(
        w_up, w_down, w_gate, tf=tf, act=act, compute_dtype=compute_dtype)
    return hymba_mlp_prepared(
        x, w1, wd_t, tf_eff, act=act, tm=tm, vmem_limit_bytes=vmem_limit_bytes,
        n_split=n_split, weight_buffers=weight_buffers, compute_dtype=compute_dtype)


def hymba_mlp_ref(x, w_gate, w_up, w_down, act="silu"):
    """Plain-JAX reference matching the PyTorch semantics."""
    if act == "silu":
        g = jnp.einsum("bsh,fh->bsf", x, w_gate)
        u = jnp.einsum("bsh,fh->bsf", x, w_up)
        h = jax.nn.silu(g) * u
    else:  # relu2
        u = jnp.einsum("bsh,fh->bsf", x, w_up)
        h = jnp.square(jax.nn.relu(u))
    return jnp.einsum("bsf,hf->bsh", h, w_down)


if __name__ == "__main__":
    # Small config: batch=2, seq=8, hidden_size=32, intermediate_size=256
    B, S, H, F = 2, 8, 32, 256
    key = jax.random.PRNGKey(0)
    kx, kg, ku, kd = jax.random.split(key, 4)

    x = jax.random.normal(kx, (B, S, H), dtype=jnp.float32)
    # torch nn.Linear weight convention: [out_features, in_features]
    w_gate = jax.random.normal(kg, (F, H), dtype=jnp.float32) * 0.05
    w_up = jax.random.normal(ku, (F, H), dtype=jnp.float32) * 0.05
    w_down = jax.random.normal(kd, (H, F), dtype=jnp.float32) * 0.05

    # 1) silu (SwiGLU) branch, multi-step F reduction (tf=128 -> 2 F tiles)
    out = jax.block_until_ready(
        hymba_mlp(x, w_gate, w_up, w_down, act="silu", tf=128))
    ref = hymba_mlp_ref(x, w_gate, w_up, w_down, act="silu")
    assert out.shape == (B, S, H)
    assert jnp.allclose(out, ref, atol=2e-5, rtol=2e-5), "silu mismatch vs reference"

    # 2) relu2 branch (no gate_proj)
    out2 = jax.block_until_ready(
        hymba_mlp(x, None, w_up, w_down, act="relu2", tf=128))
    ref2 = hymba_mlp_ref(x, None, w_up, w_down, act="relu2")
    assert jnp.allclose(out2, ref2, atol=2e-5, rtol=2e-5), "relu2 mismatch vs reference"

    # 3) ragged F (192) -> zero-padded up to a multiple of tf=128 in weight prep
    Fr = 192
    w_gate_r, w_up_r, w_down_r = w_gate[:Fr], w_up[:Fr], w_down[:, :Fr]
    out3 = jax.block_until_ready(
        hymba_mlp(x, w_gate_r, w_up_r, w_down_r, act="silu", tf=128))
    ref3 = hymba_mlp_ref(x, w_gate_r, w_up_r, w_down_r, act="silu")
    assert jnp.allclose(out3, ref3, atol=2e-5, rtol=2e-5), "F-padding mismatch"

    # 4) explicit core-split of the F reduction (decode-style path); correct on
    #    any chip, only faster on multi-TensorCore parts.
    out4 = jax.block_until_ready(
        hymba_mlp(x, w_gate, w_up, w_down, act="silu", tf=128, n_split=2))
    assert jnp.allclose(out4, ref, atol=2e-5, rtol=2e-5), "F core-split mismatch"

    print("KERNEL_OK")
</pallas_src>

<mosaic_0001>
module attributes {stable_mosaic.version = 11 : i64} {
  func.func @_hymba_mlp_kernel(%arg0: i32, %arg1: i32, %arg2: i32, %arg3: memref<16x32xf32, #tpu.memory_space<vmem>>, %arg4: memref<32x256xf32, #tpu.memory_space<vmem>>, %arg5: memref<128x32xf32, #tpu.memory_space<vmem>>, %arg6: memref<1x16x32xf32, #tpu.memory_space<vmem>>, %arg7: memref<16x32xf32, #tpu.memory_space<vmem>>) attributes {dimension_semantics = [#tpu.dimension_semantics<parallel>, #tpu.dimension_semantics<parallel>, #tpu.dimension_semantics<arbitrary>], iteration_bounds = array<i64: 1, 1, 2>, scalar_prefetch = 0 : i64, scratch_operands = 1 : i64, tpu.core_type = #tpu.core_type<tc>, window_params = [{transform_indices = @transform_0, window_bounds = array<i64: 16, 32>}, {transform_indices = @transform_1, window_bounds = array<i64: 32, 256>}, {transform_indices = @transform_2, window_bounds = array<i64: 128, 32>}, {transform_indices = @transform_3, window_bounds = array<i64: 1, 16, 32>}]} {
    %c0_i32 = arith.constant 0 : i32
    %0 = arith.cmpi eq, %arg2, %c0_i32 : i32
    %1 = arith.extui %0 : i1 to i32
    %c0_i32_0 = arith.constant 0 : i32
    %2 = arith.cmpi ne, %1, %c0_i32_0 : i32
    scf.if %2 {
      %cst_13 = arith.constant 0.000000e+00 : f32
      %23 = vector.broadcast %cst_13 : f32 to vector<16x32xf32>
      %c0_14 = arith.constant 0 : index
      %c0_15 = arith.constant 0 : index
      %24 = vector.load %arg7[%c0_14, %c0_15] : memref<16x32xf32, #tpu.memory_space<vmem>>, vector<16x32xf32>
      tpu.vector_store %arg7[%c0_14, %c0_15], %23 {strides = array<i32>} : memref<16x32xf32, #tpu.memory_space<vmem>>, vector<16x32xf32>,
    } else {
    }
    %c0 = arith.constant 0 : index
    %c0_1 = arith.constant 0 : index
    %3 = vector.load %arg3[%c0, %c0_1] : memref<16x32xf32, #tpu.memory_space<vmem>>, vector<16x32xf32>
    %c0_2 = arith.constant 0 : index
    %c0_3 = arith.constant 0 : index
    %4 = vector.load %arg4[%c0_2, %c0_3] : memref<32x256xf32, #tpu.memory_space<vmem>>, vector<32x256xf32>
    %cst = arith.constant dense<0.000000e+00> : vector<16x256xf32>
    %5 = tpu.matmul %3, %4, %cst {dimension_numbers = #tpu.dot_dimension_numbers<[1], [0], [0], [1], [0, 0, 1, 1], [], []>} : vector<16x32xf32>, vector<32x256xf32>, vector<16x256xf32> -> vector<16x256xf32>
    %6 = vector.extract_strided_slice %5 {offsets = [0, 0], sizes = [16, 128], strides = [1, 1]} : vector<16x256xf32> to vector<16x128xf32>
    %7 = vector.extract_strided_slice %5 {offsets = [0, 128], sizes = [16, 128], strides = [1, 1]} : vector<16x256xf32> to vector<16x128xf32>
    %8 = arith.negf %6 : vector<16x128xf32>
    %9 = math.exp %8 : vector<16x128xf32>
    %cst_4 = arith.constant 1.000000e+00 : f32
    %10 = vector.broadcast %cst_4 : f32 to vector<16x128xf32>
    %11 = arith.addf %10, %9 : vector<16x128xf32>
    %12 = arith.divf %10, %11 : vector<16x128xf32>
    %13 = arith.mulf %6, %12 : vector<16x128xf32>
    %14 = arith.mulf %13, %7 : vector<16x128xf32>
    %c0_5 = arith.constant 0 : index
    %c0_6 = arith.constant 0 : index
    %15 = vector.load %arg7[%c0_5, %c0_6] : memref<16x32xf32, #tpu.memory_space<vmem>>, vector<16x32xf32>
    %c0_7 = arith.constant 0 : index
    %c0_8 = arith.constant 0 : index
    %16 = vector.load %arg5[%c0_7, %c0_8] : memref<128x32xf32, #tpu.memory_space<vmem>>, vector<128x32xf32>
    %cst_9 = arith.constant dense<0.000000e+00> : vector<16x32xf32>
    %17 = tpu.matmul %14, %16, %cst_9 {dimension_numbers = #tpu.dot_dimension_numbers<[1], [0], [0], [1], [0, 0, 1, 1], [], []>} : vector<16x128xf32>, vector<128x32xf32>, vector<16x32xf32> -> vector<16x32xf32>
    %18 = arith.addf %15, %17 : vector<16x32xf32>
    %c0_10 = arith.constant 0 : index
    %c0_11 = arith.constant 0 : index
    %19 = vector.load %arg7[%c0_10, %c0_11] : memref<16x32xf32, #tpu.memory_space<vmem>>, vector<16x32xf32>
    tpu.vector_store %arg7[%c0_10, %c0_11], %18 {strides = array<i32>} : memref<16x32xf32, #tpu.memory_space<vmem>>, vector<16x32xf32>,
    %c1_i32 = arith.constant 1 : i32
    %20 = arith.cmpi eq, %arg2, %c1_i32 : i32
    %21 = arith.extui %20 : i1 to i32
    %c0_i32_12 = arith.constant 0 : i32
    %22 = arith.cmpi ne, %21, %c0_i32_12 : i32
    scf.if %22 {
      %c0_13 = arith.constant 0 : index
      %c0_14 = arith.constant 0 : index
      %23 = vector.load %arg7[%c0_13, %c0_14] : memref<16x32xf32, #tpu.memory_space<vmem>>, vector<16x32xf32>
      %c0_15 = arith.constant 0 : index
      %c0_16 = arith.constant 0 : index
      %c0_17 = arith.constant 0 : index
      %24 = vector.load %arg6[%c0_15, %c0_16, %c0_17] : memref<1x16x32xf32, #tpu.memory_space<vmem>>, vector<1x16x32xf32>
      %25 = vector.shape_cast %24 : vector<1x16x32xf32> to vector<16x32xf32>
      %26 = vector.shape_cast %23 : vector<16x32xf32> to vector<1x16x32xf32>
      tpu.vector_store %arg6[%c0_15, %c0_16, %c0_17], %26 {strides = array<i32>} : memref<1x16x32xf32, #tpu.memory_space<vmem>>, vector<1x16x32xf32>,
    } else {
    }
    return
  }
  func.func @transform_0(%arg0: i32, %arg1: i32, %arg2: i32) -> (i32, i32) {
    %c0_i32 = arith.constant 0 : i32
    %c0_i32_0 = arith.constant 0 : i32
    return %arg1, %c0_i32 : i32, i32
  }
  func.func @transform_1(%arg0: i32, %arg1: i32, %arg2: i32) -> (i32, i32) {
    %c2_i32 = arith.constant 2 : i32
    %0 = arith.muli %arg0, %c2_i32 : i32
    %1 = arith.addi %0, %arg2 : i32
    %c0_i32 = arith.constant 0 : i32
    %c0_i32_0 = arith.constant 0 : i32
    return %c0_i32, %1 : i32, i32
  }
  func.func @transform_2(%arg0: i32, %arg1: i32, %arg2: i32) -> (i32, i32) {
    %c2_i32 = arith.constant 2 : i32
    %0 = arith.muli %arg0, %c2_i32 : i32
    %1 = arith.addi %0, %arg2 : i32
    %c0_i32 = arith.constant 0 : i32
    %c0_i32_0 = arith.constant 0 : i32
    return %1, %c0_i32 : i32, i32
  }
  func.func @transform_3(%arg0: i32, %arg1: i32, %arg2: i32) -> (i32, i32, i32) {
    %c0_i32 = arith.constant 0 : i32
    %c0_i32_0 = arith.constant 0 : i32
    return %arg0, %arg1, %c0_i32 : i32, i32, i32
  }
}

</mosaic_0001>

<llo_original>
// kernel: tpu_custom_call.1
$region0: #{tpu_custom_call.1}
  #allocation0 [shape = 'u32[]', space=smem, size = 0x4, offset = 0x4, fixed_abs, tag = 'smem constant byte address 0x4 - core index']
  #allocation1 [shape = 'u32[144,128]{1,0:T(1,128)}', space=vmem, size = 0x12000, scoped, tag = 'internal scratch']
  #allocation2 [shape = 'f32[16,32]{1,0:T(8,128)}', space=vmem, size = 0x2000, scoped, tag = 'scratch operand']
  %s0 = inlined_call_operand.vmem [shape: f32[16,32], index: 0, kind: input, shape index: {}]
  %s1 = inlined_call_operand.vmem [shape: f32[32,512], index: 1, kind: input, shape index: {}]
  %s2 = inlined_call_operand.vmem [shape: f32[256,32], index: 2, kind: input, shape index: {}]
  %s3 = inlined_call_operand.hbm [shape: f32[1,16,32], index: 3, kind: output, shape index: {}]
  %s4 = sld [smem:[#allocation0]]
  $region76: #{tpu_custom_call.1} parent=0
    _
  %s6 = ssub.s32 1, %s4
  %s7 = scalar_select 0, %s6, %s4
  $region1: #{tpu_custom_call.1} parent=0
    #allocation3 [shape = 'u8[65536]{0}', space=vmem, size = 0x10000, scoped, tag = 'input window, operand 1']
    #allocation4 [shape = 'u8[8192]{0}', space=vmem, size = 0x2000, scoped, tag = 'output window, operand 0, single buffered']
    #allocation5 [shape = 's32[2]{0}', space=sflag, size = 0x8, scoped, tag = 'scoped memory for tpu_custom_call.1']
    %8 = vsyncpa [#allocation5], 0
    loop: start=0, step=1, limit=4
    $region2: #{tpu_custom_call.1} parent=1 // loop_pre_header
      _
    $region3: #{tpu_custom_call.1} parent=1 // loop_header
      %s10 = sphi 0, %s14
      %p11 = scmp.ge.s32.totalorder %s10, 4
      %s17 = sphi 0, %s36
      %s18 = sphi 0, %s32
      %s19 = sphi 0, %s28
      %s20 = sphi 0, %s17
      %s21 = sphi 0, %s18
      %s22 = sphi 0, %s19
      %s23 = sphi 0, %s20
      %s24 = sphi 0, %s21
      %s25 = sphi 0, %s22
      %s39 = sphi 0, %s41
      %s42 = sphi 0, %s39
      %s43 = sphi 0, %s42
      %s59 = sphi 0, %s43
      %s69 = sphi 0, %s71
      %s72 = sphi 0, %s69
      %s73 = sphi 0, %s72
      %s89 = sphi 0, %s73
      %s99 = sphi 0, %s101
      %s102 = sphi 0, %s99
      %s103 = sphi 0, %s102
      %s119 = sphi 0, %s103
      %s127 = sphi 0, %s129
      %s130 = sphi 0, %s127
      %s131 = sphi 0, %s130
      %s147 = sphi 0, %s131
    $region4: #{tpu_custom_call.1} parent=1 // loop_header_branch
      %13 = sbr.rel (%p11) target = $region8
    $region5: #{tpu_custom_call.1} parent=1 // loop_body
      %s15 = ssub.s32 %s10, 1
      %s16 = ssub.s32 %s10, 2
      %s26 = sadd.s32 1, %s19
      %p27 = scmp.ge.s32.totalorder %s26, 2
      %s28 = scalar_select %p27, 0, %s26
      %s29 = sadd.s32 1, %s18
      %s30 = scalar_select %p27, %s29, %s18
      %p31 = scmp.ge.s32.totalorder %s30, 1
      %s32 = scalar_select %p31, 0, %s30
      %s33 = sadd.s32 1, %s17
      %s34 = scalar_select %p31, %s33, %s17
      %p35 = scmp.ge.s32.totalorder %s34, 1
      %s36 = scalar_select %p35, 0, %s34
      %s37 = ssub.s32 %s18, %s32
      %p38 = scmp.eq.s32.totalorder %s37, 0
      %s40 = sadd.s32 %s39, 1
      %s41 = scalar_select %p38, %s39, %s40
      %p44 = pneg %p38
      %p45 = scmp.eq.s32.totalorder %s10, 1
      %p46 = por %p44, %p45
      %p47 = scmp.ne.s32.totalorder %s39, %s42
      %p48 = scmp.eq.s32.totalorder %s10, 0
      %p49 = por %p47, %p48
      %p50 = scmp.ne.s32.totalorder %s39, %s42
      %p51 = scmp.eq.s32.totalorder %s15, 1
      %p52 = por %p50, %p51
      %p53 = scmp.ne.s32.totalorder %s42, %s43
      %p54 = scmp.eq.s32.totalorder %s15, 0
      %p55 = por %p53, %p54
      %p56 = scmp.ne.s32.totalorder %s42, %s43
      %p57 = scmp.eq.s32.totalorder %s16, 1
      %p58 = por %p56, %p57
      %p60 = scmp.ne.s32.totalorder %s43, %s59
      %p61 = scmp.eq.s32.totalorder %s16, 0
      %p62 = por %p60, %p61
      %s63 = smul.u32 %s17, 2
      %s64 = sadd.s32 %s63, %s19
      %s65 = smul.u32 %s36, 2
      %s66 = sadd.s32 %s65, %s28
      %s67 = ssub.s32 %s64, %s66
      %p68 = scmp.eq.s32.totalorder %s67, 0
      %s70 = sadd.s32 %s69, 1
      %s71 = scalar_select %p68, %s69, %s70
      %p74 = pneg %p68
      %p75 = scmp.eq.s32.totalorder %s10, 1
      %p76 = por %p74, %p75
      %p77 = scmp.ne.s32.totalorder %s69, %s72
      %p78 = scmp.eq.s32.totalorder %s10, 0
      %p79 = por %p77, %p78
      %p80 = scmp.ne.s32.totalorder %s69, %s72
      %p81 = scmp.eq.s32.totalorder %s15, 1
      %p82 = por %p80, %p81
      %p83 = scmp.ne.s32.totalorder %s72, %s73
      %p84 = scmp.eq.s32.totalorder %s15, 0
      %p85 = por %p83, %p84
      %p86 = scmp.ne.s32.totalorder %s72, %s73
      %p87 = scmp.eq.s32.totalorder %s16, 1
      %p88 = por %p86, %p87
      %p90 = scmp.ne.s32.totalorder %s73, %s89
      %p91 = scmp.eq.s32.totalorder %s16, 0
      %p92 = por %p90, %p91
      %s93 = smul.u32 %s17, 2
      %s94 = sadd.s32 %s93, %s19
      %s95 = smul.u32 %s36, 2
      %s96 = sadd.s32 %s95, %s28
      %s97 = ssub.s32 %s94, %s96
      %p98 = scmp.eq.s32.totalorder %s97, 0
      %s100 = sadd.s32 %s99, 1
      %s101 = scalar_select %p98, %s99, %s100
      %p104 = pneg %p98
      %p105 = scmp.eq.s32.totalorder %s10, 1
      %p106 = por %p104, %p105
      %p107 = scmp.ne.s32.totalorder %s99, %s102
      %p108 = scmp.eq.s32.totalorder %s10, 0
      %p109 = por %p107, %p108
      %p110 = scmp.ne.s32.totalorder %s99, %s102
      %p111 = scmp.eq.s32.totalorder %s15, 1
      %p112 = por %p110, %p111
      %p113 = scmp.ne.s32.totalorder %s102, %s103
      %p114 = scmp.eq.s32.totalorder %s15, 0
      %p115 = por %p113, %p114
      %p116 = scmp.ne.s32.totalorder %s102, %s103
      %p117 = scmp.eq.s32.totalorder %s16, 1
      %p118 = por %p116, %p117
      %p120 = scmp.ne.s32.totalorder %s103, %s119
      %p121 = scmp.eq.s32.totalorder %s16, 0
      %p122 = por %p120, %p121
      %s123 = ssub.s32 %s17, %s36
      %s124 = ssub.s32 %s18, %s32
      %s125 = sor.u32 %s123, %s124
      %p126 = scmp.eq.s32.totalorder %s125, 0
      %s128 = sadd.s32 %s127, 1
      %s129 = scalar_select %p126, %s127, %s128
      %p132 = pneg %p126
      %p133 = scmp.eq.s32.totalorder %s10, 1
      %p134 = por %p132, %p133
      %p135 = scmp.ne.s32.totalorder %s127, %s130
      %p136 = scmp.eq.s32.totalorder %s10, 0
      %p137 = por %p135, %p136
      %p138 = scmp.ne.s32.totalorder %s127, %s130
      %p139 = scmp.eq.s32.totalorder %s15, 1
      %p140 = por %p138, %p139
      %p141 = scmp.ne.s32.totalorder %s130, %s131
      %p142 = scmp.eq.s32.totalorder %s15, 0
      %p143 = por %p141, %p142
      %p144 = scmp.ne.s32.totalorder %s130, %s131
      %p145 = scmp.eq.s32.totalorder %s16, 1
      %p146 = por %p144, %p145
      %p148 = scmp.ne.s32.totalorder %s131, %s147
      %p149 = scmp.eq.s32.totalorder %s16, 0
      %p150 = por %p148, %p149
      %p151 = scmp.le.s32.totalorder 1, %s10
      %p152 = scmp.lt.s32.totalorder %s10, 3
      %p153 = pnand %p151, %p152
      %p154 = pneg %p153
      // Predicated region
      $region9: #{tpu_custom_call.1} parent=5 // pred_check
        _
      $region10: #{tpu_custom_call.1} parent=5 // pred_check_branch
        %156 = sbr.rel (%p153) target = $region12
      $region11: #{tpu_custom_call.1} parent=5 // pred_region
        %s157 = ssub.s32 %s10, 1
        // Predicated region
        $region13: #{tpu_custom_call.1} parent=11 // pred_check
          %p158 = pneg %p55
        $region14: #{tpu_custom_call.1} parent=11 // pred_check_branch
          %160 = sbr.rel (%p158) target = $region16
        $region15: #{tpu_custom_call.1} parent=11 // pred_region
          %s161 = smul.u32 2, %s21
          %p162 = scmp.lt.s32.totalorder %s161, 1
          %s163 = scalar_select %p162, %s161, 1
          %s164 = smul.addr %s163, 8
          %s165 = scalar_lea.vmem %s0, %s164
          %s166 = smul.u32 2, %s21
        $region16: #{tpu_custom_call.1} parent=11 // pred_fallthru
          _
      $region12: #{tpu_custom_call.1} parent=5 // pred_fallthru
        _
      %p167 = scmp.lt.s32.totalorder %s10, 2
      // Predicated region
      $region17: #{tpu_custom_call.1} parent=5 // pred_check
        %p168 = pneg %p167
      $region18: #{tpu_custom_call.1} parent=5 // pred_check_branch
        %170 = sbr.rel (%p168) target = $region20
      $region19: #{tpu_custom_call.1} parent=5 // pred_region
        // Predicated region
        $region21: #{tpu_custom_call.1} parent=19 // pred_check
          %p171 = pneg %p79
        $region22: #{tpu_custom_call.1} parent=19 // pred_check_branch
          %173 = sbr.rel (%p171) target = $region24
        $region23: #{tpu_custom_call.1} parent=19 // pred_region
          %s174 = sand.u32 %s69, 1
          %s175 = sand.u32 %s69, 1
          %s176 = smul.addr %s175, 64
          %s177 = scalar_lea.vmem [#allocation3], %s176
          %s178 = smul.u32 %s17, 2
          %s179 = sadd.s32 %s178, %s19
          %s180 = smul.u32 2, %s179
          %s181 = smul.addr %s180, 8
          %s182 = scalar_lea.vmem %s1, %s181
          // Predicated region
          $region25: #{tpu_custom_call.1} parent=23 // pred_check
            _
          $region26: #{tpu_custom_call.1} parent=23 // pred_check_branch
            %184 = sbr.rel (0) target = $region28
          $region27: #{tpu_custom_call.1} parent=23 // pred_region
            // Predicated region
            $region29: #{tpu_custom_call.1} parent=27 // pred_check
              _
            $region30: #{tpu_custom_call.1} parent=27 // pred_check_branch
              %186 = sbr.rel (0) target = $region32
            $region31: #{tpu_custom_call.1} parent=27 // pred_region
              loop: start=0, step=1, limit=1
              $region33: #{tpu_custom_call.1} parent=31 // loop_pre_header
                _
              $region34: #{tpu_custom_call.1} parent=31 // loop_header
                %s188 = sphi 0, %s192
                %p189 = scmp.ge.s32.totalorder %s188, 1
                %s193 = sphi %s182, %s182
                %s194 = sphi %s177, %s177
              $region35: #{tpu_custom_call.1} parent=31 // loop_header_branch
                %191 = sbr.rel (%p189) target = $region39
              $region36: #{tpu_custom_call.1} parent=31 // loop_body
                %v195 = vld [vmem:[%s193] sm:$0xff]
                %196 = vst [vmem:[%s194] sm:$0xff] %v195
                %v197 = vld [vmem:[%s193 + $0x8] sm:$0xff]
                %198 = vst [vmem:[%s194 + $0x8] sm:$0xff] %v197
                %v199 = vld [vmem:[%s193 + $0x20] sm:$0xff]
                %200 = vst [vmem:[%s194 + $0x10] sm:$0xff] %v199
                %v201 = vld [vmem:[%s193 + $0x28] sm:$0xff]
                %202 = vst [vmem:[%s194 + $0x18] sm:$0xff] %v201
                %v203 = vld [vmem:[%s193 + $0x40] sm:$0xff]
                %204 = vst [vmem:[%s194 + $0x20] sm:$0xff] %v203
                %v205 = vld [vmem:[%s193 + $0x48] sm:$0xff]
                %206 = vst [vmem:[%s194 + $0x28] sm:$0xff] %v205
                %v207 = vld [vmem:[%s193 + $0x60] sm:$0xff]
                %208 = vst [vmem:[%s194 + $0x30] sm:$0xff] %v207
                %v209 = vld [vmem:[%s193 + $0x68] sm:$0xff]
                %210 = vst [vmem:[%s194 + $0x38] sm:$0xff] %v209
              $region37: #{tpu_custom_call.1} parent=31 // loop_footer
                %s192 = sadd.s32 1, %s188
              $region38: #{tpu_custom_call.1} parent=31 // loop_footer_branch
                %187 = sbr.rel target = $region34
              $region39: #{tpu_custom_call.1} parent=31 // loop_exit
                _
            $region32: #{tpu_custom_call.1} parent=27 // pred_fallthru
              _
            // Predicated region
            $region40: #{tpu_custom_call.1} parent=27 // pred_check
              _
            $region41: #{tpu_custom_call.1} parent=27 // pred_check_branch
              %212 = sbr.rel target = $region43
            $region42: #{tpu_custom_call.1} parent=27 // pred_region
              _
            $region43: #{tpu_custom_call.1} parent=27 // pred_fallthru
              _
          $region28: #{tpu_custom_call.1} parent=23 // pred_fallthru
            _
          %213 = vnop
        $region24: #{tpu_custom_call.1} parent=19 // pred_fallthru
          _
        // Predicated region
        $region44: #{tpu_custom_call.1} parent=19 // pred_check
          %p214 = pneg %p109
        $region45: #{tpu_custom_call.1} parent=19 // pred_check_branch
          %216 = sbr.rel (%p214) target = $region47
        $region46: #{tpu_custom_call.1} parent=19 // pred_region
          %s217 = smul.u32 %s17, 2
          %s218 = sadd.s32 %s217, %s19
          %s219 = smul.u32 16, %s218
          %p220 = scmp.lt.s32.totalorder %s219, 31
          %s221 = scalar_select %p220, %s219, 31
          %s222 = smul.addr %s221, 8
          %s223 = scalar_lea.vmem %s2, %s222
          %s224 = smul.u32 %s17, 2
          %s225 = sadd.s32 %s224, %s19
          %s226 = smul.u32 16, %s225
        $region47: #{tpu_custom_call.1} parent=19 // pred_fallthru
          _
      $region20: #{tpu_custom_call.1} parent=5 // pred_fallthru
        _
      %p227 = scmp.le.s32.totalorder 1, %s10
      %p228 = scmp.lt.s32.totalorder %s10, 3
      %p229 = pnand %p227, %p228
      %p230 = pneg %p229
      // Predicated region
      $region48: #{tpu_custom_call.1} parent=5 // pred_check
        _
      $region49: #{tpu_custom_call.1} parent=5 // pred_check_branch
        %232 = sbr.rel (%p229) target = $region51
      $region50: #{tpu_custom_call.1} parent=5 // pred_region
        %s233 = ssub.s32 %s10, 1
        %s234 = sand.u32 %s72, 1
        %s235 = sand.u32 %s72, 1
        %s236 = smul.addr %s235, 64
        %s237 = scalar_lea.vmem [#allocation3], %s236
        // Predicated region
        $region52: #{tpu_custom_call.1} parent=50 // pred_check
          %p238 = pneg %p85
        $region53: #{tpu_custom_call.1} parent=50 // pred_check_branch
          %240 = sbr.rel (%p238) target = $region55
        $region54: #{tpu_custom_call.1} parent=50 // pred_region
          _
        $region55: #{tpu_custom_call.1} parent=50 // pred_fallthru
          _
        %s241 = smul.u32 2, %s21
        %p242 = scmp.lt.s32.totalorder %s241, 1
        %s243 = scalar_select %p242, %s241, 1
        %s244 = smul.addr %s243, 8
        %s245 = scalar_lea.vmem %s0, %s244
        %p246 = pneg %p55
        %p247 = pneg %p52
        %s248 = sand.u32 %s72, 1
        %s249 = sand.u32 %s72, 1
        %s250 = smul.addr %s249, 64
        %s251 = scalar_lea.vmem [#allocation3], %s250
        %p252 = pneg %p85
        %p253 = pneg %p82
        %s254 = smul.u32 %s20, 2
        %s255 = sadd.s32 %s254, %s22
        %s256 = smul.u32 16, %s255
        %p257 = scmp.lt.s32.totalorder %s256, 31
        %s258 = scalar_select %p257, %s256, 31
        %s259 = smul.addr %s258, 8
        %s260 = scalar_lea.vmem %s2, %s259
        %p261 = pneg %p115
        %p262 = pneg %p112
        %p263 = pneg %p143
        %p264 = pneg %p140
        %s265 = smul.u32 2, %s21
        %p266 = scmp.lt.s32.totalorder %s265, 1
        %s267 = scalar_select %p266, %s265, 1
        %s268 = smul.addr %s267, 8
        %s269 = scalar_lea.vmem %s0, %s268
        %s270 = smul.u32 2, %s21
        %s271 = smul.u32 %s20, 2
        %s272 = sadd.s32 %s271, %s22
        %s273 = smul.u32 2, %s272
        %s274 = smul.u32 %s20, 2
        %s275 = sadd.s32 %s274, %s22
        %s276 = smul.u32 16, %s275
        %p277 = scmp.lt.s32.totalorder %s276, 31
        %s278 = scalar_select %p277, %s276, 31
        %s279 = smul.addr %s278, 8
        %s280 = scalar_lea.vmem %s2, %s279
        %s281 = smul.u32 %s20, 2
        %s282 = sadd.s32 %s281, %s22
        %s283 = smul.u32 16, %s282
        %s284 = smul.u32 2, %s21
        %p285 = scmp.eq.s32.totalorder %s22, 0
        // Predicated region
        $region56: #{tpu_custom_call.1} parent=50 // pred_check
          %p286 = pneg %p285
        $region57: #{tpu_custom_call.1} parent=50 // pred_check_branch
          %288 = sbr.rel (%p286) target = $region59
        $region58: #{tpu_custom_call.1} parent=50 // pred_region
          %vm289 = vcmask 261120
          %290 = vst.msk [vmem:[#allocation2] sm:$0xff] %vm289, 0.0
          %291 = vst.msk [vmem:[#allocation2 + $0x8] sm:$0xff] %vm289, 0.0
        $region59: #{tpu_custom_call.1} parent=50 // pred_fallthru
          _
        %v292 = vld [vmem:[%s269] sm:$0xff]
        %v293 = vld [vmem:[%s269 + $0x8] sm:$0xff]
        %v294 = vld [vmem:[%s237] sm:$0xff]
        %v295 = vld [vmem:[%s237 + $0x8] sm:$0xff]
        %v296 = vld [vmem:[%s237 + $0x10] sm:$0xff]
        %v297 = vld [vmem:[%s237 + $0x18] sm:$0xff]
        %v298 = vld [vmem:[%s237 + $0x20] sm:$0xff]
        %v299 = vld [vmem:[%s237 + $0x28] sm:$0xff]
        %v300 = vld [vmem:[%s237 + $0x30] sm:$0xff]
        %v301 = vld [vmem:[%s237 + $0x38] sm:$0xff]
        %vm302 = vcmask 261120
        %v304 = vsel %vm302, %v292, 0
        %v307 = vsel %vm302, %v293, 0
        %309 = vmatprep.subr.mxu0 0.0
        %310 = vmatpush1.msra.mxu0 0.0
        %311 = vmatprep.subr.mxu0 0.0
        %312 = vmatpush1.msra.mxu0 0.0
        %313 = vmatprep.subr.mxu0 0.0
        %314 = vmatpush1.msra.mxu0 0.0
        %315 = vmatprep.subr.mxu0 0.0
        %316 = vmatpush1.msra.mxu0 0.0
        %317 = vmatprep.subr.mxu0 0.0
        %318 = vmatpush1.msra.mxu0 0.0
        %319 = vmatprep.subr.mxu0 0.0
        %320 = vmatpush1.msra.mxu0 0.0
        %321 = vmatprep.subr.mxu0 0.0
        %322 = vmatpush1.msra.mxu0 0.0
        %323 = vmatprep.subr.mxu0 0.0
        %324 = vmatpush1.msra.mxu0 0.0
        %325 = vmatprep.subr.mxu0 0.0
        %326 = vmatpush1.msra.mxu0 0.0
        %327 = vmatprep.subr.mxu0 0.0
        %328 = vmatpush1.msra.mxu0 0.0
        %329 = vmatprep.subr.mxu0 0.0
        %330 = vmatpush1.msra.mxu0 0.0
        %331 = vmatprep.subr.mxu0 0.0
        %332 = vmatpush1.msra.mxu0 0.0
        %333 = vmatprep.subr.mxu0 %v301
        %334 = vmatpush1.msra.mxu0 %v300
        %335 = vmatprep.subr.mxu0 %v299
        %336 = vmatpush1.msra.mxu0 %v298
        %337 = vmatprep.subr.mxu0 %v297
        %338 = vmatpush1.msra.mxu0 %v296
        %339 = vmatprep.subr.mxu0 %v295
        %340 = vmatpush1.msra.mxu0 %v294
        %341 = vmatprep.subr.mxu0 0.0
        %342 = vmatpush2.msra.mxu0 0.0
        %343 = vmatprep.subr.mxu0 0.0
        %344 = vmatpush2.msra.mxu0 0.0
        %345 = vmatprep.subr.mxu0 0.0
        %346 = vmatpush2.msra.mxu0 0.0
        %347 = vmatprep.subr.mxu0 0.0
        %348 = vmatpush2.msra.mxu0 0.0
        %349 = vmatprep.subr.mxu0 0.0
        %350 = vmatpush2.msra.mxu0 0.0
        %351 = vmatprep.subr.mxu0 0.0
        %352 = vmatpush2.msra.mxu0 0.0
        %353 = vmatprep.subr.mxu0 0.0
        %354 = vmatpush2.msra.mxu0 0.0
        %355 = vmatprep.subr.mxu0 0.0
        %356 = vmatpush2.msra.mxu0 0.0
        %357 = vmatprep.subr.mxu0 0.0
        %358 = vmatpush2.msra.mxu0 0.0
        %359 = vmatprep.subr.mxu0 0.0
        %360 = vmatpush2.msra.mxu0 0.0
        %361 = vmatprep.subr.mxu0 0.0
        %362 = vmatpush2.msra.mxu0 0.0
        %363 = vmatprep.subr.mxu0 0.0
        %364 = vmatpush2.msra.mxu0 0.0
        %365 = vmatprep.subr.mxu0 0.0
        %366 = vmatpush2.msra.mxu0 0.0
        %367 = vmatprep.subr.mxu0 0.0
        %368 = vmatpush2.msra.mxu0 0.0
        %369 = vmatprep.subr.mxu0 0.0
        %370 = vmatpush2.msra.mxu0 0.0
        %371 = vmatprep.subr.mxu0 0.0
        %372 = vmatpush2.msra.mxu0 0.0
        %373 = vmatprep.mubr.f32.mxu0 0.0
        %374 = vmatmul.mubr.f32.gmra.mxu0 %v304
        %v375 = vpop.f32.mrf.mxu0
        %v376 = vadd.f32 0.0, %v375
        %v377 = vpop.f32.mrf.mxu0
        %v378 = vadd.f32 0.0, %v377
        %379 = vmatprep.mubr.f32.mxu0 0.0
        %380 = vmatmul.mubr.f32.gmra.mxu0 %v307
        %v381 = vpop.f32.mrf.mxu0
        %v382 = vadd.f32 0.0, %v381
        %v383 = vpop.f32.mrf.mxu0
        %v384 = vadd.f32 0.0, %v383
        %385 = vdwg.mxu0
        %v386 = vxor.u32 %v376, 2147483648
        %v387 = vxor.u32 %v382, 2147483648
        %v388 = vmul.f32 %v386, 1.442695
        %v389 = vpow.pop %v388
        %v390 = vmul.f32 %v387, 1.442695
        %v391 = vpow.pop %v390
        %v392 = vadd.f32 %v389, 1.0
        %v393 = vadd.f32 %v391, 1.0
        %v394 = vrcp.pop %v392
        %v395 = vmul.f32 1.0, %v394
        %v396 = vrcp.pop %v393
        %v397 = vmul.f32 1.0, %v396
        %v398 = vmul.f32 %v376, %v395
        %v399 = vmul.f32 %v382, %v397
        %v400 = vmul.f32 %v398, %v378
        %v401 = vmul.f32 %v399, %v384
        %v402 = vld [vmem:[#allocation2] sm:$0xff]
        %v403 = vld [vmem:[#allocation2 + $0x8] sm:$0xff]
        %v404 = vld [vmem:[%s280] sm:$0xff]
        %v405 = vld [vmem:[%s280 + $0x8] sm:$0xff]
        %v406 = vld [vmem:[%s280 + $0x10] sm:$0xff]
        %v407 = vld [vmem:[%s280 + $0x18] sm:$0xff]
        %v408 = vld [vmem:[%s280 + $0x20] sm:$0xff]
        %v409 = vld [vmem:[%s280 + $0x28] sm:$0xff]
        %v410 = vld [vmem:[%s280 + $0x30] sm:$0xff]
        %v411 = vld [vmem:[%s280 + $0x38] sm:$0xff]
        %v412 = vld [vmem:[%s280 + $0x40] sm:$0xff]
        %v413 = vld [vmem:[%s280 + $0x48] sm:$0xff]
        %v414 = vld [vmem:[%s280 + $0x50] sm:$0xff]
        %v415 = vld [vmem:[%s280 + $0x58] sm:$0xff]
        %v416 = vld [vmem:[%s280 + $0x60] sm:$0xff]
        %v417 = vld [vmem:[%s280 + $0x68] sm:$0xff]
        %v418 = vld [vmem:[%s280 + $0x70] sm:$0xff]
        %v419 = vld [vmem:[%s280 + $0x78] sm:$0xff]
        %420 = vmatprep.subr.mxu0 0.0
        %421 = vmatpush1.msra.mxu0 %v419
        %422 = vmatprep.subr.mxu0 0.0
        %423 = vmatpush1.msra.mxu0 %v418
        %424 = vmatprep.subr.mxu0 0.0
        %425 = vmatpush1.msra.mxu0 %v417
        %426 = vmatprep.subr.mxu0 0.0
        %427 = vmatpush1.msra.mxu0 %v416
        %428 = vmatprep.subr.mxu0 0.0
        %429 = vmatpush1.msra.mxu0 %v415
        %430 = vmatprep.subr.mxu0 0.0
        %431 = vmatpush1.msra.mxu0 %v414
        %432 = vmatprep.subr.mxu0 0.0
        %433 = vmatpush1.msra.mxu0 %v413
        %434 = vmatprep.subr.mxu0 0.0
        %435 = vmatpush1.msra.mxu0 %v412
        %436 = vmatprep.subr.mxu0 0.0
        %437 = vmatpush1.msra.mxu0 %v411
        %438 = vmatprep.subr.mxu0 0.0
        %439 = vmatpush1.msra.mxu0 %v410
        %440 = vmatprep.subr.mxu0 0.0
        %441 = vmatpush1.msra.mxu0 %v409
        %442 = vmatprep.subr.mxu0 0.0
        %443 = vmatpush1.msra.mxu0 %v408
        %444 = vmatprep.subr.mxu0 0.0
        %445 = vmatpush1.msra.mxu0 %v407
        %446 = vmatprep.subr.mxu0 0.0
        %447 = vmatpush1.msra.mxu0 %v406
        %448 = vmatprep.subr.mxu0 0.0
        %449 = vmatpush1.msra.mxu0 %v405
        %450 = vmatprep.subr.mxu0 0.0
        %451 = vmatpush1.msra.mxu0 %v404
        %452 = vmatprep.subr.mxu0 0.0
        %453 = vmatpush2.msra.mxu0 0.0
        %454 = vmatprep.subr.mxu0 0.0
        %455 = vmatpush2.msra.mxu0 0.0
        %456 = vmatprep.subr.mxu0 0.0
        %457 = vmatpush2.msra.mxu0 0.0
        %458 = vmatprep.subr.mxu0 0.0
        %459 = vmatpush2.msra.mxu0 0.0
        %460 = vmatprep.subr.mxu0 0.0
        %461 = vmatpush2.msra.mxu0 0.0
        %462 = vmatprep.subr.mxu0 0.0
        %463 = vmatpush2.msra.mxu0 0.0
        %464 = vmatprep.subr.mxu0 0.0
        %465 = vmatpush2.msra.mxu0 0.0
        %466 = vmatprep.subr.mxu0 0.0
        %467 = vmatpush2.msra.mxu0 0.0
        %468 = vmatprep.subr.mxu0 0.0
        %469 = vmatpush2.msra.mxu0 0.0
        %470 = vmatprep.subr.mxu0 0.0
        %471 = vmatpush2.msra.mxu0 0.0
        %472 = vmatprep.subr.mxu0 0.0
        %473 = vmatpush2.msra.mxu0 0.0
        %474 = vmatprep.subr.mxu0 0.0
        %475 = vmatpush2.msra.mxu0 0.0
        %476 = vmatprep.subr.mxu0 0.0
        %477 = vmatpush2.msra.mxu0 0.0
        %478 = vmatprep.subr.mxu0 0.0
        %479 = vmatpush2.msra.mxu0 0.0
        %480 = vmatprep.subr.mxu0 0.0
        %481 = vmatpush2.msra.mxu0 0.0
        %482 = vmatprep.subr.mxu0 0.0
        %483 = vmatpush2.msra.mxu0 0.0
        %484 = vmatprep.mubr.f32.mxu0 0.0
        %485 = vmatmul.mubr.f32.gmra.mxu0 %v400
        %v486 = vpop.f32.mrf.mxu0
        %v487 = vadd.f32 0.0, %v486
        %v488 = vpop.f32.mrf.mxu0
        %489 = vmatprep.mubr.f32.mxu0 0.0
        %490 = vmatmul.mubr.f32.gmra.mxu0 %v401
        %v491 = vpop.f32.mrf.mxu0
        %v492 = vadd.f32 0.0, %v491
        %v493 = vpop.f32.mrf.mxu0
        %494 = vdwg.mxu0
        %v495 = vadd.f32 %v402, %v487
        %v496 = vadd.f32 %v403, %v492
        %497 = vst.msk [vmem:[#allocation2] sm:$0xff] %vm302, %v495
        %498 = vst.msk [vmem:[#allocation2 + $0x8] sm:$0xff] %vm302, %v496
        %p499 = scmp.eq.s32.totalorder %s22, 1
        // Predicated region
        $region60: #{tpu_custom_call.1} parent=50 // pred_check
          %p500 = pneg %p499
        $region61: #{tpu_custom_call.1} parent=50 // pred_check_branch
          %502 = sbr.rel (%p500) target = $region63
        $region62: #{tpu_custom_call.1} parent=50 // pred_region
          %v503 = vld [vmem:[#allocation2] sm:$0xff]
          %v504 = vld [vmem:[#allocation2 + $0x8] sm:$0xff]
          %505 = vst.msk [vmem:[#allocation4] sm:$0xff] %vm302, %v503
          %506 = vst.msk [vmem:[#allocation4 + $0x8] sm:$0xff] %vm302, %v504
        $region63: #{tpu_custom_call.1} parent=50 // pred_fallthru
          _
        // Predicated region
        $region64: #{tpu_custom_call.1} parent=50 // pred_check
          %p507 = pneg %p140
        $region65: #{tpu_custom_call.1} parent=50 // pred_check_branch
          %509 = sbr.rel (%p507) target = $region67
        $region66: #{tpu_custom_call.1} parent=50 // pred_region
          %s510 = smul.u32 2, %s21
          %s512 = ssub.s32 256, 256
          %513 = vsyncadd [#allocation5], %s512
          %s514 = smul.addr %s20, 2
          %s515 = sadd.s32 %s510, %s514
          %s516 = smul.addr %s515, 128
          %s517 = scalar_lea.hbm %s3, %s516
          %s518 = sshll.u32 [#allocation4], 4
          %s519 = int_to_ptr.vmem [resolvable:$true] %s518
          %524 = dma.vmem_to_hbm [thread:$0]  %s519, 256, %s517, [#allocation5], 128, 128, 8
        $region67: #{tpu_custom_call.1} parent=50 // pred_fallthru
          _
        // Predicated region
        $region68: #{tpu_custom_call.1} parent=50 // pred_check
          %p525 = pneg %p140
        $region69: #{tpu_custom_call.1} parent=50 // pred_check_branch
          %527 = sbr.rel (%p525) target = $region71
        $region70: #{tpu_custom_call.1} parent=50 // pred_region
          %528 = dma.done [#allocation5], 256
        $region71: #{tpu_custom_call.1} parent=50 // pred_fallthru
          _
      $region51: #{tpu_custom_call.1} parent=5 // pred_fallthru
        _
      %p529 = scmp.le.s32.totalorder 2, %s10
      // Predicated region
      $region72: #{tpu_custom_call.1} parent=5 // pred_check
        %p530 = pneg %p529
      $region73: #{tpu_custom_call.1} parent=5 // pred_check_branch
        %532 = sbr.rel (%p530) target = $region75
      $region74: #{tpu_custom_call.1} parent=5 // pred_region
        %s533 = ssub.s32 %s10, 2
      $region75: #{tpu_custom_call.1} parent=5 // pred_fallthru
        _
    $region6: #{tpu_custom_call.1} parent=1 // loop_footer
      %s14 = sadd.s32 1, %s10
    $region7: #{tpu_custom_call.1} parent=1 // loop_footer_branch
      %9 = sbr.rel target = $region3
    $region8: #{tpu_custom_call.1} parent=1 // loop_exit
      _
    %534 = vsyncpa [#allocation5], 1
    %s535 = scalar_lea.sflag [#allocation5], 1
    %536 = vsyncpa %s535, 1

</llo_original>
